<compile_context>
chip_gen: v7x
topology: tpu7x:2x2x1
jax: 0.10.0
libtpu: 0.0.40
codegen_flags: <defaults>
</compile_context>

<pallas_src>
import jax
import jax.numpy as jnp
from jax import lax
from jax.experimental import pallas as pl
from jax.experimental.pallas import tpu as pltpu

EPS = 1e-5  # PyTorch nn.LayerNorm default eps


def _round_up(x, m):
    return ((x + m - 1) // m) * m


def _layernorm(h, gamma, beta):
    mean = jnp.mean(h, axis=-1, keepdims=True)
    var = jnp.mean((h - mean) * (h - mean), axis=-1, keepdims=True)
    return (h - mean) * lax.rsqrt(var + EPS) * gamma + beta


def mlp_kernel(x_ref,
               w1_ref, b1_ref, g1_ref, be1_ref,
               w2_ref, b2_ref, g2_ref, be2_ref,
               w3_ref, b3_ref,
               o_ref):
    # f32 tile from HBM; cast to bf16 on the VPU (hidden under DMA/MXU).
    x = x_ref[...].astype(jnp.bfloat16)

    # Linear(768 -> 256): bf16 MXU inputs, f32 accumulation; ReLU + LN in f32.
    h = jnp.dot(x, w1_ref[...], preferred_element_type=jnp.float32) + b1_ref[...]
    h = jnp.maximum(h, 0.0)
    h = _layernorm(h, g1_ref[...], be1_ref[...])

    # Linear(256 -> 128) + ReLU + LayerNorm(128)
    h = jnp.dot(h.astype(jnp.bfloat16), w2_ref[...],
                preferred_element_type=jnp.float32) + b2_ref[...]
    h = jnp.maximum(h, 0.0)
    h = _layernorm(h, g2_ref[...], be2_ref[...])

    # Linear(128 -> classes_padded) — lane-dense final width, bf16 store.
    out = jnp.dot(h.astype(jnp.bfloat16), w3_ref[...],
                  preferred_element_type=jnp.float32) + b3_ref[...]
    o_ref[...] = out.astype(o_ref.dtype)


def prepare_params(raw_params):
    """One-time parameter prep (hoisted out of the per-call path)."""
    (w1, b1, g1, be1, w2, b2, g2, be2, w3, b3) = raw_params
    C = w3.shape[1]
    CP = max(128, _round_up(C, 128))
    w1b = w1.astype(jnp.bfloat16)
    w2b = w2.astype(jnp.bfloat16)
    w3p = jnp.zeros((w3.shape[0], CP), jnp.bfloat16).at[:, :C].set(
        w3.astype(jnp.bfloat16))
    b3p = jnp.zeros((1, CP), jnp.float32).at[:, :C].set(b3)
    prepared = (w1b, b1, g1, be1, w2b, b2, g2, be2, w3p, b3p)
    return jax.tree_util.tree_map(jax.block_until_ready, prepared), C


def mlp_forward(features, prepared_params, classes, *, block_b=512):
    """features: [B, featureLength] float32. Returns [B, classes] float32."""
    (w1b, b1, g1, be1, w2b, b2, g2, be2, w3p, b3p) = prepared_params
    B, F = features.shape
    H1 = w1b.shape[1]
    H2 = w2b.shape[1]
    CP = w3p.shape[1]

    # Batch tile: for large batches aim for >= 4 grid steps (both v7x TCs busy,
    # intra-TC DMA/compute overlap) with a 512-row cap (v6e pipelining knee,
    # ~3-4 MiB VMEM footprint fits every generation).  Small batches round up
    # to 16 rows for clean bf16 vreg packing.
    if B >= 256:
        bb = min(block_b, max(256, _round_up(pl.cdiv(B, 4), 256)))
    else:
        bb = _round_up(B, 16)
    grid = (pl.cdiv(B, bb),)

    full = lambda shape: pl.BlockSpec(shape, lambda i: (0, 0))

    out = pl.pallas_call(
        mlp_kernel,
        out_shape=jax.ShapeDtypeStruct((B, CP), jnp.bfloat16),
        grid_spec=pltpu.PrefetchScalarGridSpec(
            num_scalar_prefetch=0,
            grid=grid,
            in_specs=[
                pl.BlockSpec((bb, F), lambda i: (i, 0)),          # x tile (f32)
                full((F, H1)), full((1, H1)), full((1, H1)), full((1, H1)),
                full((H1, H2)), full((1, H2)), full((1, H2)), full((1, H2)),
                full((H2, CP)), full((1, CP)),
            ],
            out_specs=pl.BlockSpec((bb, CP), lambda i: (i, 0)),
        ),
        compiler_params=pltpu.CompilerParams(
            dimension_semantics=("parallel",),
            vmem_limit_bytes=32 * 1024 * 1024),
    )(features, w1b, b1, g1, be1, w2b, b2, g2, be2, w3p, b3p)

    return out[:, :classes].astype(jnp.float32)


def init_params(key, feature_length=768, classes=2):
    """Deterministic synthetic parameters (same shapes as the PyTorch module)."""
    ks = jax.random.split(key, 6)
    # Linear weights stored as [in, out]; biases as [1, out] for broadcasting.
    w1 = jax.random.normal(ks[0], (feature_length, 256), jnp.float32) * 0.02
    b1 = jax.random.normal(ks[1], (1, 256), jnp.float32) * 0.02
    w2 = jax.random.normal(ks[2], (256, 128), jnp.float32) * 0.02
    b2 = jax.random.normal(ks[3], (1, 128), jnp.float32) * 0.02
    w3 = jax.random.normal(ks[4], (128, classes), jnp.float32) * 0.02
    b3 = jax.random.normal(ks[5], (1, classes), jnp.float32) * 0.02
    # LayerNorm affine params (PyTorch defaults: ones / zeros).
    g1 = jnp.ones((1, 256), jnp.float32)
    be1 = jnp.zeros((1, 256), jnp.float32)
    g2 = jnp.ones((1, 128), jnp.float32)
    be2 = jnp.zeros((1, 128), jnp.float32)
    return (w1, b1, g1, be1, w2, b2, g2, be2, w3, b3)


def mlp_reference_f32(features, raw_params):
    """Pure-f32 JAX reference matching the PyTorch module's forward pass."""
    (w1, b1, g1, be1, w2, b2, g2, be2, w3, b3) = raw_params
    h = jnp.dot(features, w1) + b1
    h = jnp.maximum(h, 0.0)
    h = _layernorm(h, g1, be1)
    h = jnp.dot(h, w2) + b2
    h = jnp.maximum(h, 0.0)
    h = _layernorm(h, g2, be2)
    return jnp.dot(h, w3) + b3


if __name__ == "__main__":
    key = jax.random.PRNGKey(0)
    k_feat, k_feat_big, k_param = jax.random.split(key, 3)

    feature_length = 768
    classes = 2
    raw_params = init_params(k_param, feature_length, classes)
    prepared_params, _ = prepare_params(raw_params)   # one-time prep

    # --- small demo batch (as in the original module usage) ---
    batch = 8
    features = jax.random.normal(k_feat, (batch, feature_length), jnp.float32)
    # `race` / `lengths` are unused in the PyTorch forward; kept for parity.
    race = jnp.zeros((batch,), jnp.int32)

    preds = jax.block_until_ready(mlp_forward(features, prepared_params, classes))
    ref = mlp_reference_f32(features, raw_params)
    assert preds.shape == (batch, classes)
    assert jnp.allclose(preds, ref, atol=3e-2, rtol=3e-2)

    # --- larger batch: exercises the multi-step grid + partial last block ---
    big_batch = 1000
    features_big = jax.random.normal(k_feat_big, (big_batch, feature_length),
                                     jnp.float32)
    preds_big = jax.block_until_ready(
        mlp_forward(features_big, prepared_params, classes))
    ref_big = mlp_reference_f32(features_big, raw_params)
    assert preds_big.shape == (big_batch, classes)
    assert jnp.allclose(preds_big, ref_big, atol=3e-2, rtol=3e-2)

    print("KERNEL_OK")
</pallas_src>

<mosaic_0001>
module attributes {stable_mosaic.version = 11 : i64} {
  func.func @mlp_kernel(%arg0: i32, %arg1: memref<16x768xf32, #tpu.memory_space<vmem>>, %arg2: memref<768x256xbf16, #tpu.memory_space<vmem>>, %arg3: memref<1x256xf32, #tpu.memory_space<vmem>>, %arg4: memref<1x256xf32, #tpu.memory_space<vmem>>, %arg5: memref<1x256xf32, #tpu.memory_space<vmem>>, %arg6: memref<256x128xbf16, #tpu.memory_space<vmem>>, %arg7: memref<1x128xf32, #tpu.memory_space<vmem>>, %arg8: memref<1x128xf32, #tpu.memory_space<vmem>>, %arg9: memref<1x128xf32, #tpu.memory_space<vmem>>, %arg10: memref<128x128xbf16, #tpu.memory_space<vmem>>, %arg11: memref<1x128xf32, #tpu.memory_space<vmem>>, %arg12: memref<16x128xbf16, #tpu.memory_space<vmem>>) attributes {dimension_semantics = [#tpu.dimension_semantics<parallel>], iteration_bounds = array<i64: 1>, scalar_prefetch = 0 : i64, scratch_operands = 0 : i64, tpu.core_type = #tpu.core_type<tc>, window_params = [{transform_indices = @transform_0, window_bounds = array<i64: 16, 768>}, {pipeline_mode = #tpu.pipeline_mode<synchronous>, transform_indices = @transform_1, window_bounds = array<i64: 768, 256>}, {pipeline_mode = #tpu.pipeline_mode<synchronous>, transform_indices = @transform_2, window_bounds = array<i64: 1, 256>}, {pipeline_mode = #tpu.pipeline_mode<synchronous>, transform_indices = @transform_3, window_bounds = array<i64: 1, 256>}, {pipeline_mode = #tpu.pipeline_mode<synchronous>, transform_indices = @transform_4, window_bounds = array<i64: 1, 256>}, {pipeline_mode = #tpu.pipeline_mode<synchronous>, transform_indices = @transform_5, window_bounds = array<i64: 256, 128>}, {pipeline_mode = #tpu.pipeline_mode<synchronous>, transform_indices = @transform_6, window_bounds = array<i64: 1, 128>}, {pipeline_mode = #tpu.pipeline_mode<synchronous>, transform_indices = @transform_7, window_bounds = array<i64: 1, 128>}, {pipeline_mode = #tpu.pipeline_mode<synchronous>, transform_indices = @transform_8, window_bounds = array<i64: 1, 128>}, {pipeline_mode = #tpu.pipeline_mode<synchronous>, transform_indices = @transform_9, window_bounds = array<i64: 128, 128>}, {pipeline_mode = #tpu.pipeline_mode<synchronous>, transform_indices = @transform_10, window_bounds = array<i64: 1, 128>}, {transform_indices = @transform_11, window_bounds = array<i64: 16, 128>}]} {
    %c0 = arith.constant 0 : index
    %c0_0 = arith.constant 0 : index
    %0 = vector.load %arg1[%c0, %c0_0] : memref<16x768xf32, #tpu.memory_space<vmem>>, vector<16x768xf32>
    %1 = arith.truncf %0 : vector<16x768xf32> to vector<16x768xbf16>
    %c0_1 = arith.constant 0 : index
    %c0_2 = arith.constant 0 : index
    %2 = vector.load %arg2[%c0_1, %c0_2] : memref<768x256xbf16, #tpu.memory_space<vmem>>, vector<768x256xbf16>
    %cst = arith.constant dense<0.000000e+00> : vector<16x256xf32>
    %3 = tpu.matmul %1, %2, %cst {dimension_numbers = #tpu.dot_dimension_numbers<[1], [0], [0], [1], [0, 0, 1, 1], [], []>} : vector<16x768xbf16>, vector<768x256xbf16>, vector<16x256xf32> -> vector<16x256xf32>
    %c0_3 = arith.constant 0 : index
    %c0_4 = arith.constant 0 : index
    %4 = vector.load %arg3[%c0_3, %c0_4] : memref<1x256xf32, #tpu.memory_space<vmem>>, vector<1x256xf32>
    %5 = vector.broadcast %4 : vector<1x256xf32> to vector<16x256xf32>
    %6 = arith.addf %3, %5 : vector<16x256xf32>
    %cst_5 = arith.constant 0.000000e+00 : f32
    %7 = vector.broadcast %cst_5 : f32 to vector<16x256xf32>
    %8 = arith.maximumf %6, %7 : vector<16x256xf32>
    %c0_6 = arith.constant 0 : index
    %c0_7 = arith.constant 0 : index
    %9 = vector.load %arg4[%c0_6, %c0_7] : memref<1x256xf32, #tpu.memory_space<vmem>>, vector<1x256xf32>
    %c0_8 = arith.constant 0 : index
    %c0_9 = arith.constant 0 : index
    %10 = vector.load %arg5[%c0_8, %c0_9] : memref<1x256xf32, #tpu.memory_space<vmem>>, vector<1x256xf32>
    %cst_10 = arith.constant dense<0.000000e+00> : vector<16xf32>
    %11 = vector.multi_reduction <add>, %8, %cst_10 [1] : vector<16x256xf32> to vector<16xf32>
    %12 = vector.shape_cast %11 : vector<16xf32> to vector<16x1xf32>
    %cst_11 = arith.constant 2.560000e+02 : f32
    %13 = vector.broadcast %cst_11 : f32 to vector<16x1xf32>
    %14 = arith.divf %12, %13 : vector<16x1xf32>
    %15 = vector.broadcast %14 : vector<16x1xf32> to vector<16x256xf32>
    %16 = arith.subf %8, %15 : vector<16x256xf32>
    %17 = vector.broadcast %14 : vector<16x1xf32> to vector<16x256xf32>
    %18 = arith.subf %8, %17 : vector<16x256xf32>
    %19 = arith.mulf %16, %18 : vector<16x256xf32>
    %cst_12 = arith.constant dense<0.000000e+00> : vector<16xf32>
    %20 = vector.multi_reduction <add>, %19, %cst_12 [1] : vector<16x256xf32> to vector<16xf32>
    %21 = vector.shape_cast %20 : vector<16xf32> to vector<16x1xf32>
    %cst_13 = arith.constant 2.560000e+02 : f32
    %22 = vector.broadcast %cst_13 : f32 to vector<16x1xf32>
    %23 = arith.divf %21, %22 : vector<16x1xf32>
    %24 = vector.broadcast %14 : vector<16x1xf32> to vector<16x256xf32>
    %25 = arith.subf %8, %24 : vector<16x256xf32>
    %cst_14 = arith.constant 9.99999974E-6 : f32
    %26 = vector.broadcast %cst_14 : f32 to vector<16x1xf32>
    %27 = arith.addf %23, %26 : vector<16x1xf32>
    %28 = math.rsqrt %27 : vector<16x1xf32>
    %29 = vector.broadcast %28 : vector<16x1xf32> to vector<16x256xf32>
    %30 = arith.mulf %25, %29 : vector<16x256xf32>
    %31 = vector.broadcast %9 : vector<1x256xf32> to vector<16x256xf32>
    %32 = arith.mulf %30, %31 : vector<16x256xf32>
    %33 = vector.broadcast %10 : vector<1x256xf32> to vector<16x256xf32>
    %34 = arith.addf %32, %33 : vector<16x256xf32>
    %35 = arith.truncf %34 : vector<16x256xf32> to vector<16x256xbf16>
    %c0_15 = arith.constant 0 : index
    %c0_16 = arith.constant 0 : index
    %36 = vector.load %arg6[%c0_15, %c0_16] : memref<256x128xbf16, #tpu.memory_space<vmem>>, vector<256x128xbf16>
    %cst_17 = arith.constant dense<0.000000e+00> : vector<16x128xf32>
    %37 = tpu.matmul %35, %36, %cst_17 {dimension_numbers = #tpu.dot_dimension_numbers<[1], [0], [0], [1], [0, 0, 1, 1], [], []>} : vector<16x256xbf16>, vector<256x128xbf16>, vector<16x128xf32> -> vector<16x128xf32>
    %c0_18 = arith.constant 0 : index
    %c0_19 = arith.constant 0 : index
    %38 = vector.load %arg7[%c0_18, %c0_19] : memref<1x128xf32, #tpu.memory_space<vmem>>, vector<1x128xf32>
    %39 = vector.broadcast %38 : vector<1x128xf32> to vector<16x128xf32>
    %40 = arith.addf %37, %39 : vector<16x128xf32>
    %cst_20 = arith.constant 0.000000e+00 : f32
    %41 = vector.broadcast %cst_20 : f32 to vector<16x128xf32>
    %42 = arith.maximumf %40, %41 : vector<16x128xf32>
    %c0_21 = arith.constant 0 : index
    %c0_22 = arith.constant 0 : index
    %43 = vector.load %arg8[%c0_21, %c0_22] : memref<1x128xf32, #tpu.memory_space<vmem>>, vector<1x128xf32>
    %c0_23 = arith.constant 0 : index
    %c0_24 = arith.constant 0 : index
    %44 = vector.load %arg9[%c0_23, %c0_24] : memref<1x128xf32, #tpu.memory_space<vmem>>, vector<1x128xf32>
    %cst_25 = arith.constant dense<0.000000e+00> : vector<16xf32>
    %45 = vector.multi_reduction <add>, %42, %cst_25 [1] : vector<16x128xf32> to vector<16xf32>
    %46 = vector.shape_cast %45 : vector<16xf32> to vector<16x1xf32>
    %cst_26 = arith.constant 1.280000e+02 : f32
    %47 = vector.broadcast %cst_26 : f32 to vector<16x1xf32>
    %48 = arith.divf %46, %47 : vector<16x1xf32>
    %49 = vector.broadcast %48 : vector<16x1xf32> to vector<16x128xf32>
    %50 = arith.subf %42, %49 : vector<16x128xf32>
    %51 = vector.broadcast %48 : vector<16x1xf32> to vector<16x128xf32>
    %52 = arith.subf %42, %51 : vector<16x128xf32>
    %53 = arith.mulf %50, %52 : vector<16x128xf32>
    %cst_27 = arith.constant dense<0.000000e+00> : vector<16xf32>
    %54 = vector.multi_reduction <add>, %53, %cst_27 [1] : vector<16x128xf32> to vector<16xf32>
    %55 = vector.shape_cast %54 : vector<16xf32> to vector<16x1xf32>
    %cst_28 = arith.constant 1.280000e+02 : f32
    %56 = vector.broadcast %cst_28 : f32 to vector<16x1xf32>
    %57 = arith.divf %55, %56 : vector<16x1xf32>
    %58 = vector.broadcast %48 : vector<16x1xf32> to vector<16x128xf32>
    %59 = arith.subf %42, %58 : vector<16x128xf32>
    %cst_29 = arith.constant 9.99999974E-6 : f32
    %60 = vector.broadcast %cst_29 : f32 to vector<16x1xf32>
    %61 = arith.addf %57, %60 : vector<16x1xf32>
    %62 = math.rsqrt %61 : vector<16x1xf32>
    %63 = vector.broadcast %62 : vector<16x1xf32> to vector<16x128xf32>
    %64 = arith.mulf %59, %63 : vector<16x128xf32>
    %65 = vector.broadcast %43 : vector<1x128xf32> to vector<16x128xf32>
    %66 = arith.mulf %64, %65 : vector<16x128xf32>
    %67 = vector.broadcast %44 : vector<1x128xf32> to vector<16x128xf32>
    %68 = arith.addf %66, %67 : vector<16x128xf32>
    %69 = arith.truncf %68 : vector<16x128xf32> to vector<16x128xbf16>
    %c0_30 = arith.constant 0 : index
    %c0_31 = arith.constant 0 : index
    %70 = vector.load %arg10[%c0_30, %c0_31] : memref<128x128xbf16, #tpu.memory_space<vmem>>, vector<128x128xbf16>
    %cst_32 = arith.constant dense<0.000000e+00> : vector<16x128xf32>
    %71 = tpu.matmul %69, %70, %cst_32 {dimension_numbers = #tpu.dot_dimension_numbers<[1], [0], [0], [1], [0, 0, 1, 1], [], []>} : vector<16x128xbf16>, vector<128x128xbf16>, vector<16x128xf32> -> vector<16x128xf32>
    %c0_33 = arith.constant 0 : index
    %c0_34 = arith.constant 0 : index
    %72 = vector.load %arg11[%c0_33, %c0_34] : memref<1x128xf32, #tpu.memory_space<vmem>>, vector<1x128xf32>
    %73 = vector.broadcast %72 : vector<1x128xf32> to vector<16x128xf32>
    %74 = arith.addf %71, %73 : vector<16x128xf32>
    %75 = arith.truncf %74 : vector<16x128xf32> to vector<16x128xbf16>
    %c0_35 = arith.constant 0 : index
    %c0_36 = arith.constant 0 : index
    %76 = vector.load %arg12[%c0_35, %c0_36] : memref<16x128xbf16, #tpu.memory_space<vmem>>, vector<16x128xbf16>
    tpu.vector_store %arg12[%c0_35, %c0_36], %75 {strides = array<i32>} : memref<16x128xbf16, #tpu.memory_space<vmem>>, vector<16x128xbf16>,
    return
  }
  func.func @transform_0(%arg0: i32) -> (i32, i32) {
    %c0_i32 = arith.constant 0 : i32
    %c0_i32_0 = arith.constant 0 : i32
    return %arg0, %c0_i32 : i32, i32
  }
  func.func @transform_1(%arg0: i32) -> (i32, i32) {
    %c0_i32 = arith.constant 0 : i32
    %c0_i32_0 = arith.constant 0 : i32
    %c0_i32_1 = arith.constant 0 : i32
    return %c0_i32, %c0_i32_0 : i32, i32
  }
  func.func @transform_2(%arg0: i32) -> (i32, i32) {
    %c0_i32 = arith.constant 0 : i32
    %c0_i32_0 = arith.constant 0 : i32
    %c0_i32_1 = arith.constant 0 : i32
    return %c0_i32, %c0_i32_0 : i32, i32
  }
  func.func @transform_3(%arg0: i32) -> (i32, i32) {
    %c0_i32 = arith.constant 0 : i32
    %c0_i32_0 = arith.constant 0 : i32
    %c0_i32_1 = arith.constant 0 : i32
    return %c0_i32, %c0_i32_0 : i32, i32
  }
  func.func @transform_4(%arg0: i32) -> (i32, i32) {
    %c0_i32 = arith.constant 0 : i32
    %c0_i32_0 = arith.constant 0 : i32
    %c0_i32_1 = arith.constant 0 : i32
    return %c0_i32, %c0_i32_0 : i32, i32
  }
  func.func @transform_5(%arg0: i32) -> (i32, i32) {
    %c0_i32 = arith.constant 0 : i32
    %c0_i32_0 = arith.constant 0 : i32
    %c0_i32_1 = arith.constant 0 : i32
    return %c0_i32, %c0_i32_0 : i32, i32
  }
  func.func @transform_6(%arg0: i32) -> (i32, i32) {
    %c0_i32 = arith.constant 0 : i32
    %c0_i32_0 = arith.constant 0 : i32
    %c0_i32_1 = arith.constant 0 : i32
    return %c0_i32, %c0_i32_0 : i32, i32
  }
  func.func @transform_7(%arg0: i32) -> (i32, i32) {
    %c0_i32 = arith.constant 0 : i32
    %c0_i32_0 = arith.constant 0 : i32
    %c0_i32_1 = arith.constant 0 : i32
    return %c0_i32, %c0_i32_0 : i32, i32
  }
  func.func @transform_8(%arg0: i32) -> (i32, i32) {
    %c0_i32 = arith.constant 0 : i32
    %c0_i32_0 = arith.constant 0 : i32
    %c0_i32_1 = arith.constant 0 : i32
    return %c0_i32, %c0_i32_0 : i32, i32
  }
  func.func @transform_9(%arg0: i32) -> (i32, i32) {
    %c0_i32 = arith.constant 0 : i32
    %c0_i32_0 = arith.constant 0 : i32
    %c0_i32_1 = arith.constant 0 : i32
    return %c0_i32, %c0_i32_0 : i32, i32
  }
  func.func @transform_10(%arg0: i32) -> (i32, i32) {
    %c0_i32 = arith.constant 0 : i32
    %c0_i32_0 = arith.constant 0 : i32
    %c0_i32_1 = arith.constant 0 : i32
    return %c0_i32, %c0_i32_0 : i32, i32
  }
  func.func @transform_11(%arg0: i32) -> (i32, i32) {
    %c0_i32 = arith.constant 0 : i32
    %c0_i32_0 = arith.constant 0 : i32
    return %arg0, %c0_i32 : i32, i32
  }
}

</mosaic_0001>

<llo_original>
// kernel: tpu_custom_call.1
$region0: #{tpu_custom_call.1}
  #allocation0 [shape = 'u32[]', space=smem, size = 0x4, offset = 0x4, fixed_abs, tag = 'smem constant byte address 0x4 - core index']
  #allocation1 [shape = 'u32[144,128]{1,0:T(1,128)}', space=vmem, size = 0x12000, scoped, tag = 'internal scratch']
  %s0 = inlined_call_operand.hbm [shape: f32[8,768], index: 0, kind: input, shape index: {}]
  %s1 = inlined_call_operand.hbm [shape: bf16[768,256], index: 1, kind: input, shape index: {}]
  %s2 = inlined_call_operand.vmem [shape: f32[1,256], index: 2, kind: input, shape index: {}]
  %s3 = inlined_call_operand.vmem [shape: f32[1,256], index: 3, kind: input, shape index: {}]
  %s4 = inlined_call_operand.vmem [shape: f32[1,256], index: 4, kind: input, shape index: {}]
  %s5 = inlined_call_operand.hbm [shape: bf16[256,128], index: 5, kind: input, shape index: {}]
  %s6 = inlined_call_operand.vmem [shape: f32[1,128], index: 6, kind: input, shape index: {}]
  %s7 = inlined_call_operand.vmem [shape: f32[1,128], index: 7, kind: input, shape index: {}]
  %s8 = inlined_call_operand.vmem [shape: f32[1,128], index: 8, kind: input, shape index: {}]
  %s9 = inlined_call_operand.hbm [shape: bf16[128,128], index: 9, kind: input, shape index: {}]
  %s10 = inlined_call_operand.vmem [shape: f32[1,128], index: 10, kind: input, shape index: {}]
  %s11 = inlined_call_operand.hbm [shape: bf16[8,128], index: 11, kind: output, shape index: {}]
  %s12 = sld [smem:[#allocation0]]
  $region70: #{tpu_custom_call.1} parent=0
    _
  %s14 = ssub.s32 1, %s12
  %s15 = scalar_select 0, %s14, %s12
  $region1: #{tpu_custom_call.1} parent=0
    #allocation2 [shape = 'u8[49152]{0}', space=vmem, size = 0xc000, scoped, tag = 'input window, operand 0, single buffered']
    #allocation3 [shape = 's32[1]{0}', space=sflag, size = 0x4, scoped, tag = 'scoped memory for tpu_custom_call.1']
    #allocation4 [shape = 's32[1]{0}', space=sflag, size = 0x4, scoped, tag = 'scoped memory for tpu_custom_call.1']
    #allocation5 [shape = 'u8[393216]{0}', space=vmem, size = 0x60000, scoped, tag = 'input window, operand 1, single buffered']
    #allocation6 [shape = 's32[1]{0}', space=sflag, size = 0x4, scoped, tag = 'scoped memory for tpu_custom_call.1']
    #allocation7 [shape = 'u8[65536]{0}', space=vmem, size = 0x10000, scoped, tag = 'input window, operand 5, single buffered']
    #allocation8 [shape = 'u8[32768]{0}', space=vmem, size = 0x8000, scoped, tag = 'input window, operand 9, single buffered']
    #allocation9 [shape = 's32[1]{0}', space=sflag, size = 0x4, scoped, tag = 'scoped memory for tpu_custom_call.1']
    #allocation10 [shape = 'u8[4096]{0}', space=vmem, size = 0x1000, scoped, tag = 'output window, operand 0, single buffered']
    %16 = vsyncpa [#allocation3], 0
    %17 = vsyncpa [#allocation6], 0
    %18 = vsyncpa [#allocation9], 0
    %19 = vsyncpa [#allocation4], 0
    // Predicated region
    $region2: #{tpu_custom_call.1} parent=1 // pred_check
      _
    $region3: #{tpu_custom_call.1} parent=1 // pred_check_branch
      %21 = sbr.rel (0) target = $region5
    $region4: #{tpu_custom_call.1} parent=1 // pred_region
      %s23 = ssub.s32 1536, 768
      %24 = vsyncadd [#allocation3], %s23
      %s25 = sshll.u32 [#allocation2], 4
      %s26 = int_to_ptr.vmem [resolvable:$true] %s25
      %31 = dma.hbm_to_vmem [thread:$0]  %s0, 768, %s26, [#allocation3], 768, 768, 48
    $region5: #{tpu_custom_call.1} parent=1 // pred_fallthru
      _
    // Predicated region
    $region6: #{tpu_custom_call.1} parent=1 // pred_check
      _
    $region7: #{tpu_custom_call.1} parent=1 // pred_check_branch
      %33 = sbr.rel (0) target = $region9
    $region8: #{tpu_custom_call.1} parent=1 // pred_region
      %s35 = ssub.s32 12288, 12288
      %36 = vsyncadd [#allocation6], %s35
      %s37 = sshll.u32 [#allocation5], 4
      %s38 = int_to_ptr.vmem [resolvable:$true] %s37
      %43 = dma.hbm_to_vmem [thread:$0]  %s1, 12288, %s38, [#allocation6], 128, 128, 8
    $region9: #{tpu_custom_call.1} parent=1 // pred_fallthru
      _
    // Predicated region
    $region10: #{tpu_custom_call.1} parent=1 // pred_check
      _
    $region11: #{tpu_custom_call.1} parent=1 // pred_check_branch
      %45 = sbr.rel (0) target = $region13
    $region12: #{tpu_custom_call.1} parent=1 // pred_region
      _
    $region13: #{tpu_custom_call.1} parent=1 // pred_fallthru
      _
    // Predicated region
    $region14: #{tpu_custom_call.1} parent=1 // pred_check
      _
    $region15: #{tpu_custom_call.1} parent=1 // pred_check_branch
      %47 = sbr.rel (0) target = $region17
    $region16: #{tpu_custom_call.1} parent=1 // pred_region
      _
    $region17: #{tpu_custom_call.1} parent=1 // pred_fallthru
      _
    // Predicated region
    $region18: #{tpu_custom_call.1} parent=1 // pred_check
      _
    $region19: #{tpu_custom_call.1} parent=1 // pred_check_branch
      %49 = sbr.rel (0) target = $region21
    $region20: #{tpu_custom_call.1} parent=1 // pred_region
      _
    $region21: #{tpu_custom_call.1} parent=1 // pred_fallthru
      _
    // Predicated region
    $region22: #{tpu_custom_call.1} parent=1 // pred_check
      _
    $region23: #{tpu_custom_call.1} parent=1 // pred_check_branch
      %51 = sbr.rel (0) target = $region25
    $region24: #{tpu_custom_call.1} parent=1 // pred_region
      %s53 = ssub.s32 2048, 2048
      %54 = vsyncadd [#allocation6], %s53
      %s55 = sshll.u32 [#allocation7], 4
      %s56 = int_to_ptr.vmem [resolvable:$true] %s55
      %61 = dma.hbm_to_vmem [thread:$0]  %s5, 2048, %s56, [#allocation6], 64, 64, 4
    $region25: #{tpu_custom_call.1} parent=1 // pred_fallthru
      _
    // Predicated region
    $region26: #{tpu_custom_call.1} parent=1 // pred_check
      _
    $region27: #{tpu_custom_call.1} parent=1 // pred_check_branch
      %63 = sbr.rel (0) target = $region29
    $region28: #{tpu_custom_call.1} parent=1 // pred_region
      _
    $region29: #{tpu_custom_call.1} parent=1 // pred_fallthru
      _
    // Predicated region
    $region30: #{tpu_custom_call.1} parent=1 // pred_check
      _
    $region31: #{tpu_custom_call.1} parent=1 // pred_check_branch
      %65 = sbr.rel (0) target = $region33
    $region32: #{tpu_custom_call.1} parent=1 // pred_region
      _
    $region33: #{tpu_custom_call.1} parent=1 // pred_fallthru
      _
    // Predicated region
    $region34: #{tpu_custom_call.1} parent=1 // pred_check
      _
    $region35: #{tpu_custom_call.1} parent=1 // pred_check_branch
      %67 = sbr.rel (0) target = $region37
    $region36: #{tpu_custom_call.1} parent=1 // pred_region
      _
    $region37: #{tpu_custom_call.1} parent=1 // pred_fallthru
      _
    // Predicated region
    $region38: #{tpu_custom_call.1} parent=1 // pred_check
      _
    $region39: #{tpu_custom_call.1} parent=1 // pred_check_branch
      %69 = sbr.rel (0) target = $region41
    $region40: #{tpu_custom_call.1} parent=1 // pred_region
      %s71 = ssub.s32 1024, 1024
      %72 = vsyncadd [#allocation9], %s71
      %s73 = sshll.u32 [#allocation8], 4
      %s74 = int_to_ptr.vmem [resolvable:$true] %s73
      %79 = dma.hbm_to_vmem [thread:$0]  %s9, 1024, %s74, [#allocation9], 64, 64, 4
    $region41: #{tpu_custom_call.1} parent=1 // pred_fallthru
      _
    // Predicated region
    $region42: #{tpu_custom_call.1} parent=1 // pred_check
      _
    $region43: #{tpu_custom_call.1} parent=1 // pred_check_branch
      %81 = sbr.rel (0) target = $region45
    $region44: #{tpu_custom_call.1} parent=1 // pred_region
      _
    $region45: #{tpu_custom_call.1} parent=1 // pred_fallthru
      _
    // Predicated region
    $region46: #{tpu_custom_call.1} parent=1 // pred_check
      _
    $region47: #{tpu_custom_call.1} parent=1 // pred_check_branch
      %83 = sbr.rel (0) target = $region49
    $region48: #{tpu_custom_call.1} parent=1 // pred_region
      %84 = dma.done [#allocation3], 1536
    $region49: #{tpu_custom_call.1} parent=1 // pred_fallthru
      _
    // Predicated region
    $region50: #{tpu_custom_call.1} parent=1 // pred_check
      _
    $region51: #{tpu_custom_call.1} parent=1 // pred_check_branch
      %86 = sbr.rel (0) target = $region53
    $region52: #{tpu_custom_call.1} parent=1 // pred_region
      %87 = dma.done [#allocation6], 12288
    $region53: #{tpu_custom_call.1} parent=1 // pred_fallthru
      _
    // Predicated region
    $region54: #{tpu_custom_call.1} parent=1 // pred_check
      _
    $region55: #{tpu_custom_call.1} parent=1 // pred_check_branch
      %89 = sbr.rel (0) target = $region57
    $region56: #{tpu_custom_call.1} parent=1 // pred_region
      %90 = dma.done [#allocation6], 2048
    $region57: #{tpu_custom_call.1} parent=1 // pred_fallthru
      _
    // Predicated region
    $region58: #{tpu_custom_call.1} parent=1 // pred_check
      _
    $region59: #{tpu_custom_call.1} parent=1 // pred_check_branch
      %92 = sbr.rel (0) target = $region61
    $region60: #{tpu_custom_call.1} parent=1 // pred_region
      %93 = dma.done [#allocation9], 1024
    $region61: #{tpu_custom_call.1} parent=1 // pred_fallthru
      _
    %v95 = vld [vmem:[#allocation2] sm:$0xff]
    %v96 = vld [vmem:[#allocation2 + $0x8] sm:$0xff]
    %v97 = vld [vmem:[#allocation2 + $0x10] sm:$0xff]
    %v98 = vld [vmem:[#allocation2 + $0x18] sm:$0xff]
    %v99 = vld [vmem:[#allocation2 + $0x20] sm:$0xff]
    %v100 = vld [vmem:[#allocation2 + $0x28] sm:$0xff]
    %v101 = vld [vmem:[#allocation2 + $0x30] sm:$0xff]
    %v102 = vld [vmem:[#allocation2 + $0x38] sm:$0xff]
    %v103 = vld [vmem:[#allocation2 + $0x40] sm:$0xff]
    %v104 = vld [vmem:[#allocation2 + $0x48] sm:$0xff]
    %v105 = vld [vmem:[#allocation2 + $0x50] sm:$0xff]
    %v106 = vld [vmem:[#allocation2 + $0x58] sm:$0xff]
    %v107 = vpack.c.bf16 %v101, %v95
    %v108 = vpack.c.bf16 %v102, %v96
    %v109 = vpack.c.bf16 %v103, %v97
    %v110 = vpack.c.bf16 %v104, %v98
    %v111 = vpack.c.bf16 %v105, %v99
    %v112 = vpack.c.bf16 %v106, %v100
    %v113 = vld [vmem:[#allocation5] sm:$0xff]
    %v114 = vld [vmem:[#allocation5 + $0x8] sm:$0xff]
    %v115 = vld [vmem:[#allocation5 + $0x10] sm:$0xff]
    %v116 = vld [vmem:[#allocation5 + $0x18] sm:$0xff]
    %v117 = vld [vmem:[#allocation5 + $0x20] sm:$0xff]
    %v118 = vld [vmem:[#allocation5 + $0x28] sm:$0xff]
    %v119 = vld [vmem:[#allocation5 + $0x30] sm:$0xff]
    %v120 = vld [vmem:[#allocation5 + $0x38] sm:$0xff]
    %v121 = vld [vmem:[#allocation5 + $0x40] sm:$0xff]
    %v122 = vld [vmem:[#allocation5 + $0x48] sm:$0xff]
    %v123 = vld [vmem:[#allocation5 + $0x50] sm:$0xff]
    %v124 = vld [vmem:[#allocation5 + $0x58] sm:$0xff]
    %v125 = vld [vmem:[#allocation5 + $0x60] sm:$0xff]
    %v126 = vld [vmem:[#allocation5 + $0x68] sm:$0xff]
    %v127 = vld [vmem:[#allocation5 + $0x70] sm:$0xff]
    %v128 = vld [vmem:[#allocation5 + $0x78] sm:$0xff]
    %v129 = vld [vmem:[#allocation5 + $0x80] sm:$0xff]
    %v130 = vld [vmem:[#allocation5 + $0x88] sm:$0xff]
    %v131 = vld [vmem:[#allocation5 + $0x90] sm:$0xff]
    %v132 = vld [vmem:[#allocation5 + $0x98] sm:$0xff]
    %v133 = vld [vmem:[#allocation5 + $0xa0] sm:$0xff]
    %v134 = vld [vmem:[#allocation5 + $0xa8] sm:$0xff]
    %v135 = vld [vmem:[#allocation5 + $0xb0] sm:$0xff]
    %v136 = vld [vmem:[#allocation5 + $0xb8] sm:$0xff]
    %v137 = vld [vmem:[#allocation5 + $0xc0] sm:$0xff]
    %v138 = vld [vmem:[#allocation5 + $0xc8] sm:$0xff]
    %v139 = vld [vmem:[#allocation5 + $0xd0] sm:$0xff]
    %v140 = vld [vmem:[#allocation5 + $0xd8] sm:$0xff]
    %v141 = vld [vmem:[#allocation5 + $0xe0] sm:$0xff]
    %v142 = vld [vmem:[#allocation5 + $0xe8] sm:$0xff]
    %v143 = vld [vmem:[#allocation5 + $0xf0] sm:$0xff]
    %v144 = vld [vmem:[#allocation5 + $0xf8] sm:$0xff]
    %v145 = vld [vmem:[#allocation5 + $0x100] sm:$0xff]
    %v146 = vld [vmem:[#allocation5 + $0x108] sm:$0xff]
    %v147 = vld [vmem:[#allocation5 + $0x110] sm:$0xff]
    %v148 = vld [vmem:[#allocation5 + $0x118] sm:$0xff]
    %v149 = vld [vmem:[#allocation5 + $0x120] sm:$0xff]
    %v150 = vld [vmem:[#allocation5 + $0x128] sm:$0xff]
    %v151 = vld [vmem:[#allocation5 + $0x130] sm:$0xff]
    %v152 = vld [vmem:[#allocation5 + $0x138] sm:$0xff]
    %v153 = vld [vmem:[#allocation5 + $0x140] sm:$0xff]
    %v154 = vld [vmem:[#allocation5 + $0x148] sm:$0xff]
    %v155 = vld [vmem:[#allocation5 + $0x150] sm:$0xff]
    %v156 = vld [vmem:[#allocation5 + $0x158] sm:$0xff]
    %v157 = vld [vmem:[#allocation5 + $0x160] sm:$0xff]
    %v158 = vld [vmem:[#allocation5 + $0x168] sm:$0xff]
    %v159 = vld [vmem:[#allocation5 + $0x170] sm:$0xff]
    %v160 = vld [vmem:[#allocation5 + $0x178] sm:$0xff]
    %v161 = vld [vmem:[#allocation5 + $0x180] sm:$0xff]
    %v162 = vld [vmem:[#allocation5 + $0x188] sm:$0xff]
    %v163 = vld [vmem:[#allocation5 + $0x190] sm:$0xff]
    %v164 = vld [vmem:[#allocation5 + $0x198] sm:$0xff]
    %v165 = vld [vmem:[#allocation5 + $0x1a0] sm:$0xff]
    %v166 = vld [vmem:[#allocation5 + $0x1a8] sm:$0xff]
    %v167 = vld [vmem:[#allocation5 + $0x1b0] sm:$0xff]
    %v168 = vld [vmem:[#allocation5 + $0x1b8] sm:$0xff]
    %v169 = vld [vmem:[#allocation5 + $0x1c0] sm:$0xff]
    %v170 = vld [vmem:[#allocation5 + $0x1c8] sm:$0xff]
    %v171 = vld [vmem:[#allocation5 + $0x1d0] sm:$0xff]
    %v172 = vld [vmem:[#allocation5 + $0x1d8] sm:$0xff]
    %v173 = vld [vmem:[#allocation5 + $0x1e0] sm:$0xff]
    %v174 = vld [vmem:[#allocation5 + $0x1e8] sm:$0xff]
    %v175 = vld [vmem:[#allocation5 + $0x1f0] sm:$0xff]
    %v176 = vld [vmem:[#allocation5 + $0x1f8] sm:$0xff]
    %v177 = vld [vmem:[#allocation5 + $0x200] sm:$0xff]
    %v178 = vld [vmem:[#allocation5 + $0x208] sm:$0xff]
    %v179 = vld [vmem:[#allocation5 + $0x210] sm:$0xff]
    %v180 = vld [vmem:[#allocation5 + $0x218] sm:$0xff]
    %v181 = vld [vmem:[#allocation5 + $0x220] sm:$0xff]
    %v182 = vld [vmem:[#allocation5 + $0x228] sm:$0xff]
    %v183 = vld [vmem:[#allocation5 + $0x230] sm:$0xff]
    %v184 = vld [vmem:[#allocation5 + $0x238] sm:$0xff]
    %v185 = vld [vmem:[#allocation5 + $0x240] sm:$0xff]
    %v186 = vld [vmem:[#allocation5 + $0x248] sm:$0xff]
    %v187 = vld [vmem:[#allocation5 + $0x250] sm:$0xff]
    %v188 = vld [vmem:[#allocation5 + $0x258] sm:$0xff]
    %v189 = vld [vmem:[#allocation5 + $0x260] sm:$0xff]
    %v190 = vld [vmem:[#allocation5 + $0x268] sm:$0xff]
    %v191 = vld [vmem:[#allocation5 + $0x270] sm:$0xff]
    %v192 = vld [vmem:[#allocation5 + $0x278] sm:$0xff]
    %v193 = vld [vmem:[#allocation5 + $0x280] sm:$0xff]
    %v194 = vld [vmem:[#allocation5 + $0x288] sm:$0xff]
    %v195 = vld [vmem:[#allocation5 + $0x290] sm:$0xff]
    %v196 = vld [vmem:[#allocation5 + $0x298] sm:$0xff]
    %v197 = vld [vmem:[#allocation5 + $0x2a0] sm:$0xff]
    %v198 = vld [vmem:[#allocation5 + $0x2a8] sm:$0xff]
    %v199 = vld [vmem:[#allocation5 + $0x2b0] sm:$0xff]
    %v200 = vld [vmem:[#allocation5 + $0x2b8] sm:$0xff]
    %v201 = vld [vmem:[#allocation5 + $0x2c0] sm:$0xff]
    %v202 = vld [vmem:[#allocation5 + $0x2c8] sm:$0xff]
    %v203 = vld [vmem:[#allocation5 + $0x2d0] sm:$0xff]
    %v204 = vld [vmem:[#allocation5 + $0x2d8] sm:$0xff]
    %v205 = vld [vmem:[#allocation5 + $0x2e0] sm:$0xff]
    %v206 = vld [vmem:[#allocation5 + $0x2e8] sm:$0xff]
    %v207 = vld [vmem:[#allocation5 + $0x2f0] sm:$0xff]
    %v208 = vld [vmem:[#allocation5 + $0x2f8] sm:$0xff]
    %v209 = vld [vmem:[%s2] sm:$0x3]
    %v211 = vlaneseq
    %v212 = vshrl.u32 %v211, 7
    %v213 = vsub.s32 0, %v212
    %v214 = vrot.slane %v209, %v213
    %v215 = vlaneseq
    %v216 = vshrl.u32 %v215, 7
    %v217 = vsub.s32 1, %v216
    %v218 = vrot.slane %v209, %v217
    %v317 = vunpack.c.l.b16 %v113
    %v318 = vunpack.c.h.b16 %v113
    %v319 = vunpack.c.l.b16 %v114
    %v320 = vunpack.c.h.b16 %v114
    %v321 = vunpack.c.l.b16 %v115
    %v322 = vunpack.c.h.b16 %v115
    %v323 = vunpack.c.l.b16 %v116
    %v324 = vunpack.c.h.b16 %v116
    %v325 = vunpack.c.l.b16 %v117
    %v326 = vunpack.c.h.b16 %v117
    %v327 = vunpack.c.l.b16 %v118
    %v328 = vunpack.c.h.b16 %v118
    %v329 = vunpack.c.l.b16 %v119
    %v330 = vunpack.c.h.b16 %v119
    %v331 = vunpack.c.l.b16 %v120
    %v332 = vunpack.c.h.b16 %v120
    %v333 = vunpack.c.l.b16 %v121
    %v334 = vunpack.c.h.b16 %v121
    %v335 = vunpack.c.l.b16 %v122
    %v336 = vunpack.c.h.b16 %v122
    %v337 = vunpack.c.l.b16 %v123
    %v338 = vunpack.c.h.b16 %v123
    %v339 = vunpack.c.l.b16 %v124
    %v340 = vunpack.c.h.b16 %v124
    %v341 = vunpack.c.l.b16 %v125
    %v342 = vunpack.c.h.b16 %v125
    %v343 = vunpack.c.l.b16 %v126
    %v344 = vunpack.c.h.b16 %v126
    %v345 = vunpack.c.l.b16 %v127
    %v346 = vunpack.c.h.b16 %v127
    %v347 = vunpack.c.l.b16 %v128
    %v348 = vunpack.c.h.b16 %v128
    %v349 = vunpack.c.l.b16 %v129
    %v350 = vunpack.c.h.b16 %v129
    %v351 = vunpack.c.l.b16 %v130
    %v352 = vunpack.c.h.b16 %v130
    %v353 = vunpack.c.l.b16 %v131
    %v354 = vunpack.c.h.b16 %v131
    %v355 = vunpack.c.l.b16 %v132
    %v356 = vunpack.c.h.b16 %v132
    %v357 = vunpack.c.l.b16 %v133
    %v358 = vunpack.c.h.b16 %v133
    %v359 = vunpack.c.l.b16 %v134
    %v360 = vunpack.c.h.b16 %v134
    %v361 = vunpack.c.l.b16 %v135
    %v362 = vunpack.c.h.b16 %v135
    %v363 = vunpack.c.l.b16 %v136
    %v364 = vunpack.c.h.b16 %v136
    %v365 = vunpack.c.l.b16 %v137
    %v366 = vunpack.c.h.b16 %v137
    %v367 = vunpack.c.l.b16 %v138
    %v368 = vunpack.c.h.b16 %v138
    %v369 = vunpack.c.l.b16 %v139
    %v370 = vunpack.c.h.b16 %v139
    %v371 = vunpack.c.l.b16 %v140
    %v372 = vunpack.c.h.b16 %v140
    %v373 = vunpack.c.l.b16 %v141
    %v374 = vunpack.c.h.b16 %v141
    %v375 = vunpack.c.l.b16 %v142
    %v376 = vunpack.c.h.b16 %v142
    %v377 = vunpack.c.l.b16 %v143
    %v378 = vunpack.c.h.b16 %v143
    %v379 = vunpack.c.l.b16 %v144
    %v380 = vunpack.c.h.b16 %v144
    %v381 = vunpack.c.l.b16 %v145
    %v382 = vunpack.c.h.b16 %v145
    %v383 = vunpack.c.l.b16 %v146
    %v384 = vunpack.c.h.b16 %v146
    %v385 = vunpack.c.l.b16 %v147
    %v386 = vunpack.c.h.b16 %v147
    %v387 = vunpack.c.l.b16 %v148
    %v388 = vunpack.c.h.b16 %v148
    %v389 = vunpack.c.l.b16 %v149
    %v390 = vunpack.c.h.b16 %v149
    %v391 = vunpack.c.l.b16 %v150
    %v392 = vunpack.c.h.b16 %v150
    %v393 = vunpack.c.l.b16 %v151
    %v394 = vunpack.c.h.b16 %v151
    %v395 = vunpack.c.l.b16 %v152
    %v396 = vunpack.c.h.b16 %v152
    %v397 = vunpack.c.l.b16 %v153
    %v398 = vunpack.c.h.b16 %v153
    %v399 = vunpack.c.l.b16 %v154
    %v400 = vunpack.c.h.b16 %v154
    %v401 = vunpack.c.l.b16 %v155
    %v402 = vunpack.c.h.b16 %v155
    %v403 = vunpack.c.l.b16 %v156
    %v404 = vunpack.c.h.b16 %v156
    %v405 = vunpack.c.l.b16 %v157
    %v406 = vunpack.c.h.b16 %v157
    %v407 = vunpack.c.l.b16 %v158
    %v408 = vunpack.c.h.b16 %v158
    %v409 = vunpack.c.l.b16 %v159
    %v410 = vunpack.c.h.b16 %v159
    %v411 = vunpack.c.l.b16 %v160
    %v412 = vunpack.c.h.b16 %v160
    %v413 = vunpack.c.l.b16 %v161
    %v414 = vunpack.c.h.b16 %v161
    %v415 = vunpack.c.l.b16 %v162
    %v416 = vunpack.c.h.b16 %v162
    %v417 = vunpack.c.l.b16 %v163
    %v418 = vunpack.c.h.b16 %v163
    %v419 = vunpack.c.l.b16 %v164
    %v420 = vunpack.c.h.b16 %v164
    %v421 = vunpack.c.l.b16 %v165
    %v422 = vunpack.c.h.b16 %v165
    %v423 = vunpack.c.l.b16 %v166
    %v424 = vunpack.c.h.b16 %v166
    %v425 = vunpack.c.l.b16 %v167
    %v426 = vunpack.c.h.b16 %v167
    %v427 = vunpack.c.l.b16 %v168
    %v428 = vunpack.c.h.b16 %v168
    %v429 = vunpack.c.l.b16 %v169
    %v430 = vunpack.c.h.b16 %v169
    %v431 = vunpack.c.l.b16 %v170
    %v432 = vunpack.c.h.b16 %v170
    %v433 = vunpack.c.l.b16 %v171
    %v434 = vunpack.c.h.b16 %v171
    %v435 = vunpack.c.l.b16 %v172
    %v436 = vunpack.c.h.b16 %v172
    %v437 = vunpack.c.l.b16 %v173
    %v438 = vunpack.c.h.b16 %v173
    %v439 = vunpack.c.l.b16 %v174
    %v440 = vunpack.c.h.b16 %v174
    %v441 = vunpack.c.l.b16 %v175
    %v442 = vunpack.c.h.b16 %v175
    %v443 = vunpack.c.l.b16 %v176
    %v444 = vunpack.c.h.b16 %v176
    %v445 = vunpack.c.l.b16 %v177
    %v446 = vunpack.c.h.b16 %v177
    %v447 = vunpack.c.l.b16 %v178
    %v448 = vunpack.c.h.b16 %v178
    %v449 = vunpack.c.l.b16 %v179
    %v450 = vunpack.c.h.b16 %v179
    %v451 = vunpack.c.l.b16 %v180
    %v452 = vunpack.c.h.b16 %v180
    %v453 = vunpack.c.l.b16 %v181
    %v454 = vunpack.c.h.b16 %v181
    %v455 = vunpack.c.l.b16 %v182
    %v456 = vunpack.c.h.b16 %v182
    %v457 = vunpack.c.l.b16 %v183
    %v458 = vunpack.c.h.b16 %v183
    %v459 = vunpack.c.l.b16 %v184
    %v460 = vunpack.c.h.b16 %v184
    %v461 = vunpack.c.l.b16 %v185
    %v462 = vunpack.c.h.b16 %v185
    %v463 = vunpack.c.l.b16 %v186
    %v464 = vunpack.c.h.b16 %v186
    %v465 = vunpack.c.l.b16 %v187
    %v466 = vunpack.c.h.b16 %v187
    %v467 = vunpack.c.l.b16 %v188
    %v468 = vunpack.c.h.b16 %v188
    %v469 = vunpack.c.l.b16 %v189
    %v470 = vunpack.c.h.b16 %v189
    %v471 = vunpack.c.l.b16 %v190
    %v472 = vunpack.c.h.b16 %v190
    %v473 = vunpack.c.l.b16 %v191
    %v474 = vunpack.c.h.b16 %v191
    %v475 = vunpack.c.l.b16 %v192
    %v476 = vunpack.c.h.b16 %v192
    %v477 = vunpack.c.l.b16 %v193
    %v478 = vunpack.c.h.b16 %v193
    %v479 = vunpack.c.l.b16 %v194
    %v480 = vunpack.c.h.b16 %v194
    %v481 = vunpack.c.l.b16 %v195
    %v482 = vunpack.c.h.b16 %v195
    %v483 = vunpack.c.l.b16 %v196
    %v484 = vunpack.c.h.b16 %v196
    %v485 = vunpack.c.l.b16 %v197
    %v486 = vunpack.c.h.b16 %v197
    %v487 = vunpack.c.l.b16 %v198
    %v488 = vunpack.c.h.b16 %v198
    %v489 = vunpack.c.l.b16 %v199
    %v490 = vunpack.c.h.b16 %v199
    %v491 = vunpack.c.l.b16 %v200
    %v492 = vunpack.c.h.b16 %v200
    %v493 = vunpack.c.l.b16 %v201
    %v494 = vunpack.c.h.b16 %v201
    %v495 = vunpack.c.l.b16 %v202
    %v496 = vunpack.c.h.b16 %v202
    %v497 = vunpack.c.l.b16 %v203
    %v498 = vunpack.c.h.b16 %v203
    %v499 = vunpack.c.l.b16 %v204
    %v500 = vunpack.c.h.b16 %v204
    %v501 = vunpack.c.l.b16 %v205
    %v502 = vunpack.c.h.b16 %v205
    %v503 = vunpack.c.l.b16 %v206
    %v504 = vunpack.c.h.b16 %v206
    %v505 = vunpack.c.l.b16 %v207
    %v506 = vunpack.c.h.b16 %v207
    %v507 = vunpack.c.l.b16 %v208
    %v508 = vunpack.c.h.b16 %v208
    %v509 = vpack.c.b16 %v319, %v317
    %v510 = vpack.c.b16 %v320, %v318
    %v511 = vpack.c.b16 %v323, %v321
    %v512 = vpack.c.b16 %v324, %v322
    %v513 = vpack.c.b16 %v327, %v325
    %v514 = vpack.c.b16 %v328, %v326
    %v515 = vpack.c.b16 %v331, %v329
    %v516 = vpack.c.b16 %v332, %v330
    %v517 = vpack.c.b16 %v335, %v333
    %v518 = vpack.c.b16 %v336, %v334
    %v519 = vpack.c.b16 %v339, %v337
    %v520 = vpack.c.b16 %v340, %v338
    %v521 = vpack.c.b16 %v343, %v341
    %v522 = vpack.c.b16 %v344, %v342
    %v523 = vpack.c.b16 %v347, %v345
    %v524 = vpack.c.b16 %v348, %v346
    %v525 = vpack.c.b16 %v351, %v349
    %v526 = vpack.c.b16 %v352, %v350
    %v527 = vpack.c.b16 %v355, %v353
    %v528 = vpack.c.b16 %v356, %v354
    %v529 = vpack.c.b16 %v359, %v357
    %v530 = vpack.c.b16 %v360, %v358
    %v531 = vpack.c.b16 %v363, %v361
    %v532 = vpack.c.b16 %v364, %v362
    %v533 = vpack.c.b16 %v367, %v365
    %v534 = vpack.c.b16 %v368, %v366
    %v535 = vpack.c.b16 %v371, %v369
    %v536 = vpack.c.b16 %v372, %v370
    %v537 = vpack.c.b16 %v375, %v373
    %v538 = vpack.c.b16 %v376, %v374
    %v539 = vpack.c.b16 %v379, %v377
    %v540 = vpack.c.b16 %v380, %v378
    %v541 = vpack.c.b16 %v383, %v381
    %v542 = vpack.c.b16 %v384, %v382
    %v543 = vpack.c.b16 %v387, %v385
    %v544 = vpack.c.b16 %v388, %v386
    %v545 = vpack.c.b16 %v391, %v389
    %v546 = vpack.c.b16 %v392, %v390
    %v547 = vpack.c.b16 %v395, %v393
    %v548 = vpack.c.b16 %v396, %v394
    %v549 = vpack.c.b16 %v399, %v397
    %v550 = vpack.c.b16 %v400, %v398
    %v551 = vpack.c.b16 %v403, %v401
    %v552 = vpack.c.b16 %v404, %v402
    %v553 = vpack.c.b16 %v407, %v405
    %v554 = vpack.c.b16 %v408, %v406
    %v555 = vpack.c.b16 %v411, %v409
    %v556 = vpack.c.b16 %v412, %v410
    %v557 = vpack.c.b16 %v415, %v413
    %v558 = vpack.c.b16 %v416, %v414
    %v559 = vpack.c.b16 %v419, %v417
    %v560 = vpack.c.b16 %v420, %v418
    %v561 = vpack.c.b16 %v423, %v421
    %v562 = vpack.c.b16 %v424, %v422
    %v563 = vpack.c.b16 %v427, %v425
    %v564 = vpack.c.b16 %v428, %v426
    %v565 = vpack.c.b16 %v431, %v429
    %v566 = vpack.c.b16 %v432, %v430
    %v567 = vpack.c.b16 %v435, %v433
    %v568 = vpack.c.b16 %v436, %v434
    %v569 = vpack.c.b16 %v439, %v437
    %v570 = vpack.c.b16 %v440, %v438
    %v571 = vpack.c.b16 %v443, %v441
    %v572 = vpack.c.b16 %v444, %v442
    %v573 = vpack.c.b16 %v447, %v445
    %v574 = vpack.c.b16 %v448, %v446
    %v575 = vpack.c.b16 %v451, %v449
    %v576 = vpack.c.b16 %v452, %v450
    %v577 = vpack.c.b16 %v455, %v453
    %v578 = vpack.c.b16 %v456, %v454
    %v579 = vpack.c.b16 %v459, %v457
    %v580 = vpack.c.b16 %v460, %v458
    %v581 = vpack.c.b16 %v463, %v461
    %v582 = vpack.c.b16 %v464, %v462
    %v583 = vpack.c.b16 %v467, %v465
    %v584 = vpack.c.b16 %v468, %v466
    %v585 = vpack.c.b16 %v471, %v469
    %v586 = vpack.c.b16 %v472, %v470
    %v587 = vpack.c.b16 %v475, %v473
    %v588 = vpack.c.b16 %v476, %v474
    %v589 = vpack.c.b16 %v479, %v477
    %v590 = vpack.c.b16 %v480, %v478
    %v591 = vpack.c.b16 %v483, %v481
    %v592 = vpack.c.b16 %v484, %v482
    %v593 = vpack.c.b16 %v487, %v485
    %v594 = vpack.c.b16 %v488, %v486
    %v595 = vpack.c.b16 %v491, %v489
    %v596 = vpack.c.b16 %v492, %v490
    %v597 = vpack.c.b16 %v495, %v493
    %v598 = vpack.c.b16 %v496, %v494
    %v599 = vpack.c.b16 %v499, %v497
    %v600 = vpack.c.b16 %v500, %v498
    %v601 = vpack.c.b16 %v503, %v501
    %v602 = vpack.c.b16 %v504, %v502
    %v603 = vpack.c.b16 %v507, %v505
    %v604 = vpack.c.b16 %v508, %v506
    %701 = vmatprep.subr.bf16.mxu0 %v510
    %702 = vmatpush1.bf16.msra.mxu0 %v509
    %703 = vmatprep.subr.bf16.mxu0 %v512
    %704 = vmatpush1.bf16.msra.mxu0 %v511
    %705 = vmatprep.subr.bf16.mxu0 %v514
    %706 = vmatpush1.bf16.msra.mxu0 %v513
    %707 = vmatprep.subr.bf16.mxu0 %v516
    %708 = vmatpush1.bf16.msra.mxu0 %v515
    %709 = vmatprep.subr.bf16.mxu0 %v518
    %710 = vmatpush1.bf16.msra.mxu0 %v517
    %711 = vmatprep.subr.bf16.mxu0 %v520
    %712 = vmatpush1.bf16.msra.mxu0 %v519
    %713 = vmatprep.subr.bf16.mxu0 %v522
    %714 = vmatpush1.bf16.msra.mxu0 %v521
    %715 = vmatprep.subr.bf16.mxu0 %v524
    %716 = vmatpush1.bf16.msra.mxu0 %v523
    %717 = vmatprep.subr.bf16.mxu0 %v526
    %718 = vmatpush1.bf16.msra.mxu0 %v525
    %719 = vmatprep.subr.bf16.mxu0 %v528
    %720 = vmatpush1.bf16.msra.mxu0 %v527
    %721 = vmatprep.subr.bf16.mxu0 %v530
    %722 = vmatpush1.bf16.msra.mxu0 %v529
    %723 = vmatprep.subr.bf16.mxu0 %v532
    %724 = vmatpush1.bf16.msra.mxu0 %v531
    %725 = vmatprep.subr.bf16.mxu0 %v534
    %726 = vmatpush1.bf16.msra.mxu0 %v533
    %727 = vmatprep.subr.bf16.mxu0 %v536
    %728 = vmatpush1.bf16.msra.mxu0 %v535
    %729 = vmatprep.subr.bf16.mxu0 %v538
    %730 = vmatpush1.bf16.msra.mxu0 %v537
    %731 = vmatprep.subr.bf16.mxu0 %v540
    %732 = vmatpush1.bf16.msra.mxu0 %v539
    %733 = vmatprep.mubr.bf16.mxu0 %v108
    %734 = vmatmul.mubr.bf16.gmra.mrb[0].mxu0 %v107
    %v735 = vpop.f32.mrb[0].mxu0
    %v736 = vadd.f32 %v214, %v735
    %v737 = vpop.f32.mrb[0].mxu0
    %v738 = vadd.f32 %v218, %v737
    %v739 = vpop.f32.mrb[0].mxu0
    %v740 = vadd.f32 %v214, %v739
    %v741 = vpop.f32.mrb[0].mxu0
    %v742 = vadd.f32 %v218, %v741
    %743 = vdwg.mxu0
    %744 = vmatprep.subr.bf16.mxu0 %v542
    %745 = vmatpush1.bf16.msra.mxu0 %v541
    %746 = vmatprep.subr.bf16.mxu0 %v544
    %747 = vmatpush1.bf16.msra.mxu0 %v543
    %748 = vmatprep.subr.bf16.mxu0 %v546
    %749 = vmatpush1.bf16.msra.mxu0 %v545
    %750 = vmatprep.subr.bf16.mxu0 %v548
    %751 = vmatpush1.bf16.msra.mxu0 %v547
    %752 = vmatprep.subr.bf16.mxu0 %v550
    %753 = vmatpush1.bf16.msra.mxu0 %v549
    %754 = vmatprep.subr.bf16.mxu0 %v552
    %755 = vmatpush1.bf16.msra.mxu0 %v551
    %756 = vmatprep.subr.bf16.mxu0 %v554
    %757 = vmatpush1.bf16.msra.mxu0 %v553
    %758 = vmatprep.subr.bf16.mxu0 %v556
    %759 = vmatpush1.bf16.msra.mxu0 %v555
    %760 = vmatprep.subr.bf16.mxu0 %v558
    %761 = vmatpush1.bf16.msra.mxu0 %v557
    %762 = vmatprep.subr.bf16.mxu0 %v560
    %763 = vmatpush1.bf16.msra.mxu0 %v559
    %764 = vmatprep.subr.bf16.mxu0 %v562
    %765 = vmatpush1.bf16.msra.mxu0 %v561
    %766 = vmatprep.subr.bf16.mxu0 %v564
    %767 = vmatpush1.bf16.msra.mxu0 %v563
    %768 = vmatprep.subr.bf16.mxu0 %v566
    %769 = vmatpush1.bf16.msra.mxu0 %v565
    %770 = vmatprep.subr.bf16.mxu0 %v568
    %771 = vmatpush1.bf16.msra.mxu0 %v567
    %772 = vmatprep.subr.bf16.mxu0 %v570
    %773 = vmatpush1.bf16.msra.mxu0 %v569
    %774 = vmatprep.subr.bf16.mxu0 %v572
    %775 = vmatpush1.bf16.msra.mxu0 %v571
    %776 = vmatprep.mubr.bf16.mxu0 %v110
    %777 = vmatmul.mubr.bf16.gmra.mrb[0].mxu0 %v109
    %v778 = vpop.f32.mrb[0].mxu0
    %v779 = vadd.f32 %v736, %v778
    %v780 = vpop.f32.mrb[0].mxu0
    %v781 = vadd.f32 %v738, %v780
    %v782 = vpop.f32.mrb[0].mxu0
    %v783 = vadd.f32 %v740, %v782
    %v784 = vpop.f32.mrb[0].mxu0
    %v785 = vadd.f32 %v742, %v784
    %786 = vdwg.mxu0
    %787 = vmatprep.subr.bf16.mxu0 %v574
    %788 = vmatpush1.bf16.msra.mxu0 %v573
    %789 = vmatprep.subr.bf16.mxu0 %v576
    %790 = vmatpush1.bf16.msra.mxu0 %v575
    %791 = vmatprep.subr.bf16.mxu0 %v578
    %792 = vmatpush1.bf16.msra.mxu0 %v577
    %793 = vmatprep.subr.bf16.mxu0 %v580
    %794 = vmatpush1.bf16.msra.mxu0 %v579
    %795 = vmatprep.subr.bf16.mxu0 %v582
    %796 = vmatpush1.bf16.msra.mxu0 %v581
    %797 = vmatprep.subr.bf16.mxu0 %v584
    %798 = vmatpush1.bf16.msra.mxu0 %v583
    %799 = vmatprep.subr.bf16.mxu0 %v586
    %800 = vmatpush1.bf16.msra.mxu0 %v585
    %801 = vmatprep.subr.bf16.mxu0 %v588
    %802 = vmatpush1.bf16.msra.mxu0 %v587
    %803 = vmatprep.subr.bf16.mxu0 %v590
    %804 = vmatpush1.bf16.msra.mxu0 %v589
    %805 = vmatprep.subr.bf16.mxu0 %v592
    %806 = vmatpush1.bf16.msra.mxu0 %v591
    %807 = vmatprep.subr.bf16.mxu0 %v594
    %808 = vmatpush1.bf16.msra.mxu0 %v593
    %809 = vmatprep.subr.bf16.mxu0 %v596
    %810 = vmatpush1.bf16.msra.mxu0 %v595
    %811 = vmatprep.subr.bf16.mxu0 %v598
    %812 = vmatpush1.bf16.msra.mxu0 %v597
    %813 = vmatprep.subr.bf16.mxu0 %v600
    %814 = vmatpush1.bf16.msra.mxu0 %v599
    %815 = vmatprep.subr.bf16.mxu0 %v602
    %816 = vmatpush1.bf16.msra.mxu0 %v601
    %817 = vmatprep.subr.bf16.mxu0 %v604
    %818 = vmatpush1.bf16.msra.mxu0 %v603
    %819 = vmatprep.mubr.bf16.mxu0 %v112
    %820 = vmatmul.mubr.bf16.gmra.mrb[0].mxu0 %v111
    %v821 = vpop.f32.mrb[0].mxu0
    %v822 = vadd.f32 %v779, %v821
    %v823 = vpop.f32.mrb[0].mxu0
    %v824 = vadd.f32 %v781, %v823
    %v825 = vpop.f32.mrb[0].mxu0
    %v826 = vadd.f32 %v783, %v825
    %v827 = vpop.f32.mrb[0].mxu0
    %v828 = vadd.f32 %v785, %v827
    %829 = vdwg.mxu0
    %v830 = vmax.f32 %v822, 0.0
    %v831 = vmax.f32 %v824, 0.0
    %v832 = vmax.f32 %v826, 0.0
    %v833 = vmax.f32 %v828, 0.0
    %v834 = vld [vmem:[%s3] sm:$0x3]
    %v835 = vld [vmem:[%s4] sm:$0x3]
    %v836 = vadd.f32 %v830, %v831
    %837 = vadd.xlane.f32.xlu0 %v836
    %v838 = vpop.xlane.xlu0 %837
    %v839 = vadd.f32 %v832, %v833
    %840 = vadd.xlane.f32.xlu0 %v839
    %v841 = vpop.xlane.xlu0 %840
    %v842 = vrcp.pop 256.0
    %v843 = vmul.f32 %v838, %v842
    %v844 = vmul.f32 %v841, %v842
    %v845 = vsub.f32 %v830, %v843
    %v846 = vsub.f32 %v831, %v843
    %v847 = vsub.f32 %v832, %v844
    %v848 = vsub.f32 %v833, %v844
    %v849 = vmul.f32 %v845, %v845
    %v850 = vmul.f32 %v846, %v846
    %v851 = vmul.f32 %v847, %v847
    %v852 = vmul.f32 %v848, %v848
    %v853 = vadd.f32 %v849, %v850
    %854 = vadd.xlane.f32.xlu0 %v853
    %v855 = vpop.xlane.xlu0 %854
    %v856 = vadd.f32 %v851, %v852
    %857 = vadd.xlane.f32.xlu0 %v856
    %v858 = vpop.xlane.xlu0 %857
    %v859 = vmul.f32 %v855, %v842
    %v860 = vmul.f32 %v858, %v842
    %v861 = vadd.f32 %v859, 1e-05
    %v862 = vadd.f32 %v860, 1e-05
    %v863 = vrsqrt.pop %v861
    %v864 = vrsqrt.pop %v862
    %v865 = vmul.f32 %v845, %v863
    %v866 = vmul.f32 %v846, %v863
    %v867 = vmul.f32 %v847, %v864
    %v868 = vmul.f32 %v848, %v864
    %v870 = vlaneseq
    %v871 = vshrl.u32 %v870, 7
    %v872 = vsub.s32 0, %v871
    %v873 = vrot.slane %v834, %v872
    %v874 = vlaneseq
    %v875 = vshrl.u32 %v874, 7
    %v876 = vsub.s32 1, %v875
    %v877 = vrot.slane %v834, %v876
    %v880 = vmul.f32 %v865, %v873
    %v881 = vmul.f32 %v866, %v877
    %v882 = vmul.f32 %v867, %v873
    %v883 = vmul.f32 %v868, %v877
    %v885 = vlaneseq
    %v886 = vshrl.u32 %v885, 7
    %v887 = vsub.s32 0, %v886
    %v888 = vrot.slane %v835, %v887
    %v889 = vlaneseq
    %v890 = vshrl.u32 %v889, 7
    %v891 = vsub.s32 1, %v890
    %v892 = vrot.slane %v835, %v891
    %v895 = vadd.f32 %v880, %v888
    %v896 = vadd.f32 %v881, %v892
    %v897 = vadd.f32 %v882, %v888
    %v898 = vadd.f32 %v883, %v892
    %v899 = vpack.c.bf16 %v897, %v895
    %v900 = vpack.c.bf16 %v898, %v896
    %v901 = vld [vmem:[#allocation7] sm:$0xf]
    %v902 = vld [vmem:[#allocation7 + $0x4] sm:$0xf]
    %v903 = vld [vmem:[#allocation7 + $0x8] sm:$0xf]
    %v904 = vld [vmem:[#allocation7 + $0xc] sm:$0xf]
    %v905 = vld [vmem:[#allocation7 + $0x10] sm:$0xf]
    %v906 = vld [vmem:[#allocation7 + $0x14] sm:$0xf]
    %v907 = vld [vmem:[#allocation7 + $0x18] sm:$0xf]
    %v908 = vld [vmem:[#allocation7 + $0x1c] sm:$0xf]
    %v909 = vld [vmem:[#allocation7 + $0x20] sm:$0xf]
    %v910 = vld [vmem:[#allocation7 + $0x24] sm:$0xf]
    %v911 = vld [vmem:[#allocation7 + $0x28] sm:$0xf]
    %v912 = vld [vmem:[#allocation7 + $0x2c] sm:$0xf]
    %v913 = vld [vmem:[#allocation7 + $0x30] sm:$0xf]
    %v914 = vld [vmem:[#allocation7 + $0x34] sm:$0xf]
    %v915 = vld [vmem:[#allocation7 + $0x38] sm:$0xf]
    %v916 = vld [vmem:[#allocation7 + $0x3c] sm:$0xf]
    %v917 = vld [vmem:[#allocation7 + $0x40] sm:$0xf]
    %v918 = vld [vmem:[#allocation7 + $0x44] sm:$0xf]
    %v919 = vld [vmem:[#allocation7 + $0x48] sm:$0xf]
    %v920 = vld [vmem:[#allocation7 + $0x4c] sm:$0xf]
    %v921 = vld [vmem:[#allocation7 + $0x50] sm:$0xf]
    %v922 = vld [vmem:[#allocation7 + $0x54] sm:$0xf]
    %v923 = vld [vmem:[#allocation7 + $0x58] sm:$0xf]
    %v924 = vld [vmem:[#allocation7 + $0x5c] sm:$0xf]
    %v925 = vld [vmem:[#allocation7 + $0x60] sm:$0xf]
    %v926 = vld [vmem:[#allocation7 + $0x64] sm:$0xf]
    %v927 = vld [vmem:[#allocation7 + $0x68] sm:$0xf]
    %v928 = vld [vmem:[#allocation7 + $0x6c] sm:$0xf]
    %v929 = vld [vmem:[#allocation7 + $0x70] sm:$0xf]
    %v930 = vld [vmem:[#allocation7 + $0x74] sm:$0xf]
    %v931 = vld [vmem:[#allocation7 + $0x78] sm:$0xf]
    %v932 = vld [vmem:[#allocation7 + $0x7c] sm:$0xf]
    %v933 = vld [vmem:[%s6] sm:$0x1]
    %v935 = vlaneseq
    %v936 = vshrl.u32 %v935, 7
    %v937 = vsub.s32 0, %v936
    %v938 = vrot.slane %v933, %v937
    %v972 = vunpack.c.l.b16 %v901
    %v973 = vunpack.c.l.b16 %v902
    %v974 = vunpack.c.l.b16 %v903
    %v975 = vunpack.c.l.b16 %v904
    %v976 = vunpack.c.l.b16 %v905
    %v977 = vunpack.c.l.b16 %v906
    %v978 = vunpack.c.l.b16 %v907
    %v979 = vunpack.c.l.b16 %v908
    %v980 = vunpack.c.l.b16 %v909
    %v981 = vunpack.c.l.b16 %v910
    %v982 = vunpack.c.l.b16 %v911
    %v983 = vunpack.c.l.b16 %v912
    %v984 = vunpack.c.l.b16 %v913
    %v985 = vunpack.c.l.b16 %v914
    %v986 = vunpack.c.l.b16 %v915
    %v987 = vunpack.c.l.b16 %v916
    %v988 = vunpack.c.l.b16 %v917
    %v989 = vunpack.c.l.b16 %v918
    %v990 = vunpack.c.l.b16 %v919
    %v991 = vunpack.c.l.b16 %v920
    %v992 = vunpack.c.l.b16 %v921
    %v993 = vunpack.c.l.b16 %v922
    %v994 = vunpack.c.l.b16 %v923
    %v995 = vunpack.c.l.b16 %v924
    %v996 = vunpack.c.l.b16 %v925
    %v997 = vunpack.c.l.b16 %v926
    %v998 = vunpack.c.l.b16 %v927
    %v999 = vunpack.c.l.b16 %v928
    %v1000 = vunpack.c.l.b16 %v929
    %v1001 = vunpack.c.l.b16 %v930
    %v1002 = vunpack.c.l.b16 %v931
    %v1003 = vunpack.c.l.b16 %v932
    %v1004 = vpack.c.b16 %v973, %v972
    %v1005 = vpack.c.b16 %v975, %v974
    %v1006 = vpack.c.b16 %v977, %v976
    %v1007 = vpack.c.b16 %v979, %v978
    %v1008 = vpack.c.b16 %v981, %v980
    %v1009 = vpack.c.b16 %v983, %v982
    %v1010 = vpack.c.b16 %v985, %v984
    %v1011 = vpack.c.b16 %v987, %v986
    %v1012 = vpack.c.b16 %v989, %v988
    %v1013 = vpack.c.b16 %v991, %v990
    %v1014 = vpack.c.b16 %v993, %v992
    %v1015 = vpack.c.b16 %v995, %v994
    %v1016 = vpack.c.b16 %v997, %v996
    %v1017 = vpack.c.b16 %v999, %v998
    %v1018 = vpack.c.b16 %v1001, %v1000
    %v1019 = vpack.c.b16 %v1003, %v1002
    %1036 = vmatprep.subr.bf16.mxu0 0
    %1037 = vmatpush1.bf16.msra.mxu0 %v1004
    %1038 = vmatprep.subr.bf16.mxu0 0
    %1039 = vmatpush1.bf16.msra.mxu0 %v1005
    %1040 = vmatprep.subr.bf16.mxu0 0
    %1041 = vmatpush1.bf16.msra.mxu0 %v1006
    %1042 = vmatprep.subr.bf16.mxu0 0
    %1043 = vmatpush1.bf16.msra.mxu0 %v1007
    %1044 = vmatprep.subr.bf16.mxu0 0
    %1045 = vmatpush1.bf16.msra.mxu0 %v1008
    %1046 = vmatprep.subr.bf16.mxu0 0
    %1047 = vmatpush1.bf16.msra.mxu0 %v1009
    %1048 = vmatprep.subr.bf16.mxu0 0
    %1049 = vmatpush1.bf16.msra.mxu0 %v1010
    %1050 = vmatprep.subr.bf16.mxu0 0
    %1051 = vmatpush1.bf16.msra.mxu0 %v1011
    %1052 = vmatprep.subr.bf16.mxu0 0
    %1053 = vmatpush1.bf16.msra.mxu0 %v1012
    %1054 = vmatprep.subr.bf16.mxu0 0
    %1055 = vmatpush1.bf16.msra.mxu0 %v1013
    %1056 = vmatprep.subr.bf16.mxu0 0
    %1057 = vmatpush1.bf16.msra.mxu0 %v1014
    %1058 = vmatprep.subr.bf16.mxu0 0
    %1059 = vmatpush1.bf16.msra.mxu0 %v1015
    %1060 = vmatprep.subr.bf16.mxu0 0
    %1061 = vmatpush1.bf16.msra.mxu0 %v1016
    %1062 = vmatprep.subr.bf16.mxu0 0
    %1063 = vmatpush1.bf16.msra.mxu0 %v1017
    %1064 = vmatprep.subr.bf16.mxu0 0
    %1065 = vmatpush1.bf16.msra.mxu0 %v1018
    %1066 = vmatprep.subr.bf16.mxu0 0
    %1067 = vmatpush1.bf16.msra.mxu0 %v1019
    %1068 = vmatprep.mubr.bf16.mxu0 %v900
    %1069 = vmatmul.mubr.bf16.gmra.mrb[0].mxu0 %v899
    %v1070 = vpop.f32.mrb[0].mxu0
    %v1071 = vadd.f32 %v938, %v1070
    %v1072 = vpop.f32.mrb[0].mxu0
    %v1073 = vpop.f32.mrb[0].mxu0
    %v1074 = vadd.f32 %v938, %v1073
    %v1075 = vpop.f32.mrb[0].mxu0
    %1076 = vdwg.mxu0
    %v1077 = vmax.f32 %v1071, 0.0
    %v1078 = vmax.f32 %v1074, 0.0
    %v1079 = vld [vmem:[%s7] sm:$0x1]
    %v1080 = vld [vmem:[%s8] sm:$0x1]
    %1081 = vadd.xlane.f32.xlu0 %v1077
    %v1082 = vpop.xlane.xlu0 %1081
    %1083 = vadd.xlane.f32.xlu0 %v1078
    %v1084 = vpop.xlane.xlu0 %1083
    %v1085 = vrcp.pop 128.0
    %v1086 = vmul.f32 %v1082, %v1085
    %v1087 = vmul.f32 %v1084, %v1085
    %v1088 = vsub.f32 %v1077, %v1086
    %v1089 = vsub.f32 %v1078, %v1087
    %v1090 = vmul.f32 %v1088, %v1088
    %v1091 = vmul.f32 %v1089, %v1089
    %1092 = vadd.xlane.f32.xlu0 %v1090
    %v1093 = vpop.xlane.xlu0 %1092
    %1094 = vadd.xlane.f32.xlu0 %v1091
    %v1095 = vpop.xlane.xlu0 %1094
    %v1096 = vmul.f32 %v1093, %v1085
    %v1097 = vmul.f32 %v1095, %v1085
    %v1098 = vadd.f32 %v1096, 1e-05
    %v1099 = vadd.f32 %v1097, 1e-05
    %v1100 = vrsqrt.pop %v1098
    %v1101 = vrsqrt.pop %v1099
    %v1102 = vmul.f32 %v1088, %v1100
    %v1103 = vmul.f32 %v1089, %v1101
    %v1105 = vlaneseq
    %v1106 = vshrl.u32 %v1105, 7
    %v1107 = vsub.s32 0, %v1106
    %v1108 = vrot.slane %v1079, %v1107
    %v1110 = vmul.f32 %v1102, %v1108
    %v1111 = vmul.f32 %v1103, %v1108
    %v1113 = vlaneseq
    %v1114 = vshrl.u32 %v1113, 7
    %v1115 = vsub.s32 0, %v1114
    %v1116 = vrot.slane %v1080, %v1115
    %v1118 = vadd.f32 %v1110, %v1116
    %v1119 = vadd.f32 %v1111, %v1116
    %v1120 = vpack.c.bf16 %v1119, %v1118
    %v1121 = vld [vmem:[#allocation8] sm:$0xf]
    %v1122 = vld [vmem:[#allocation8 + $0x4] sm:$0xf]
    %v1123 = vld [vmem:[#allocation8 + $0x8] sm:$0xf]
    %v1124 = vld [vmem:[#allocation8 + $0xc] sm:$0xf]
    %v1125 = vld [vmem:[#allocation8 + $0x10] sm:$0xf]
    %v1126 = vld [vmem:[#allocation8 + $0x14] sm:$0xf]
    %v1127 = vld [vmem:[#allocation8 + $0x18] sm:$0xf]
    %v1128 = vld [vmem:[#allocation8 + $0x1c] sm:$0xf]
    %v1129 = vld [vmem:[#allocation8 + $0x20] sm:$0xf]
    %v1130 = vld [vmem:[#allocation8 + $0x24] sm:$0xf]
    %v1131 = vld [vmem:[#allocation8 + $0x28] sm:$0xf]
    %v1132 = vld [vmem:[#allocation8 + $0x2c] sm:$0xf]
    %v1133 = vld [vmem:[#allocation8 + $0x30] sm:$0xf]
    %v1134 = vld [vmem:[#allocation8 + $0x34] sm:$0xf]
    %v1135 = vld [vmem:[#allocation8 + $0x38] sm:$0xf]
    %v1136 = vld [vmem:[#allocation8 + $0x3c] sm:$0xf]
    %v1137 = vld [vmem:[%s10] sm:$0x1]
    %v1139 = vlaneseq
    %v1140 = vshrl.u32 %v1139, 7
    %v1141 = vsub.s32 0, %v1140
    %v1142 = vrot.slane %v1137, %v1141
    %v1160 = vunpack.c.l.b16 %v1121
    %v1161 = vunpack.c.l.b16 %v1122
    %v1162 = vunpack.c.l.b16 %v1123
    %v1163 = vunpack.c.l.b16 %v1124
    %v1164 = vunpack.c.l.b16 %v1125
    %v1165 = vunpack.c.l.b16 %v1126
    %v1166 = vunpack.c.l.b16 %v1127
    %v1167 = vunpack.c.l.b16 %v1128
    %v1168 = vunpack.c.l.b16 %v1129
    %v1169 = vunpack.c.l.b16 %v1130
    %v1170 = vunpack.c.l.b16 %v1131
    %v1171 = vunpack.c.l.b16 %v1132
    %v1172 = vunpack.c.l.b16 %v1133
    %v1173 = vunpack.c.l.b16 %v1134
    %v1174 = vunpack.c.l.b16 %v1135
    %v1175 = vunpack.c.l.b16 %v1136
    %v1176 = vpack.c.b16 %v1161, %v1160
    %v1177 = vpack.c.b16 %v1163, %v1162
    %v1178 = vpack.c.b16 %v1165, %v1164
    %v1179 = vpack.c.b16 %v1167, %v1166
    %v1180 = vpack.c.b16 %v1169, %v1168
    %v1181 = vpack.c.b16 %v1171, %v1170
    %v1182 = vpack.c.b16 %v1173, %v1172
    %v1183 = vpack.c.b16 %v1175, %v1174
    %1192 = vmatprep.subr.bf16.mxu0 0
    %1193 = vmatpush1.bf16.msra.mxu0 %v1176
    %1194 = vmatprep.subr.bf16.mxu0 0
    %1195 = vmatpush1.bf16.msra.mxu0 %v1177
    %1196 = vmatprep.subr.bf16.mxu0 0
    %1197 = vmatpush1.bf16.msra.mxu0 %v1178
    %1198 = vmatprep.subr.bf16.mxu0 0
    %1199 = vmatpush1.bf16.msra.mxu0 %v1179
    %1200 = vmatprep.subr.bf16.mxu0 0
    %1201 = vmatpush1.bf16.msra.mxu0 %v1180
    %1202 = vmatprep.subr.bf16.mxu0 0
    %1203 = vmatpush1.bf16.msra.mxu0 %v1181
    %1204 = vmatprep.subr.bf16.mxu0 0
    %1205 = vmatpush1.bf16.msra.mxu0 %v1182
    %1206 = vmatprep.subr.bf16.mxu0 0
    %1207 = vmatpush1.bf16.msra.mxu0 %v1183
    %1208 = vmatprep.subr.bf16.mxu0 0
    %1209 = vmatpush1.bf16.msra.mxu0 0
    %1210 = vmatprep.subr.bf16.mxu0 0
    %1211 = vmatpush1.bf16.msra.mxu0 0
    %1212 = vmatprep.subr.bf16.mxu0 0
    %1213 = vmatpush1.bf16.msra.mxu0 0
    %1214 = vmatprep.subr.bf16.mxu0 0
    %1215 = vmatpush1.bf16.msra.mxu0 0
    %1216 = vmatprep.subr.bf16.mxu0 0
    %1217 = vmatpush1.bf16.msra.mxu0 0
    %1218 = vmatprep.subr.bf16.mxu0 0
    %1219 = vmatpush1.bf16.msra.mxu0 0
    %1220 = vmatprep.subr.bf16.mxu0 0
    %1221 = vmatpush1.bf16.msra.mxu0 0
    %1222 = vmatprep.subr.bf16.mxu0 0
    %1223 = vmatpush1.bf16.msra.mxu0 0
    %1224 = vmatprep.mubr.bf16.mxu0 0
    %1225 = vmatmul.mubr.bf16.gmra.mrb[0].mxu0 %v1120
    %v1226 = vpop.f32.mrb[0].mxu0
    %v1227 = vadd.f32 %v1142, %v1226
    %v1228 = vpop.f32.mrb[0].mxu0
    %v1229 = vpop.f32.mrb[0].mxu0
    %v1230 = vadd.f32 %v1142, %v1229
    %v1231 = vpop.f32.mrb[0].mxu0
    %1232 = vdwg.mxu0
    %v1233 = vpack.c.bf16 %v1230, %v1227
    %v1235 = vunpack.c.l.b16 %v1233
    %v1236 = vunpack.c.h.b16 %v1233
    %v1237 = vpack.c.b16 %v1235, %v1235
    %v1238 = vpack.c.b16 %v1236, %v1236
    %1241 = vst [vmem:[#allocation10] sm:$0xf] %v1237
    %1242 = vst [vmem:[#allocation10 + $0x4] sm:$0xf] %v1238
    // Predicated region
    $region62: #{tpu_custom_call.1} parent=1 // pred_check
      _
    $region63: #{tpu_custom_call.1} parent=1 // pred_check_branch
      %1244 = sbr.rel (0) target = $region65
    $region64: #{tpu_custom_call.1} parent=1 // pred_region
      %s1246 = ssub.s32 128, 64
      %1247 = vsyncadd [#allocation4], %s1246
      %s1248 = sshll.u32 [#allocation10], 4
      %s1249 = int_to_ptr.vmem [resolvable:$true] %s1248
      %1254 = dma.vmem_to_hbm [thread:$0]  %s1249, 64, %s11, [#allocation4], 64, 64, 4
    $region65: #{tpu_custom_call.1} parent=1 // pred_fallthru
      _
    // Predicated region
    $region66: #{tpu_custom_call.1} parent=1 // pred_check
      _
    $region67: #{tpu_custom_call.1} parent=1 // pred_check_branch
      %1256 = sbr.rel (0) target = $region69
    $region68: #{tpu_custom_call.1} parent=1 // pred_region
      %1257 = dma.done [#allocation4], 128
    $region69: #{tpu_custom_call.1} parent=1 // pred_fallthru
      _
    %1258 = vsyncpa [#allocation3], 1
    %1259 = vsyncpa [#allocation6], 1
    %1260 = vsyncpa [#allocation9], 1
    %1261 = vsyncpa [#allocation4], 1

</llo_original>
